<compile_context>
chip_gen: v7x
topology: tpu7x:2x2x1
jax: 0.10.0
libtpu: 0.0.40
codegen_flags: <defaults>
</compile_context>

<pallas_src>
import jax
import jax.numpy as jnp
from jax.experimental import pallas as pl
from jax.experimental.pallas import tpu as pltpu


def _round_up(x: int, m: int) -> int:
    return ((x + m - 1) // m) * m


def rnn_kernel(x_ref, wih_ref, whh_ref, bias_ref, wfc_ref, bfc_ref,
               out_ref, xp_ref, h_ref):
    seq_len, bpad, epad = x_ref.shape
    hpad = h_ref.shape[1]

    # --- Prologue: batched input projection for ALL timesteps (one big matmul).
    x_all = x_ref[...].reshape(seq_len * bpad, epad)          # (S*B, E)
    xp = jnp.dot(x_all, wih_ref[...],
                 preferred_element_type=jnp.float32) + bias_ref[...]
    xp_ref[...] = xp.reshape(seq_len, bpad, hpad)             # (S, B, H)

    # --- Recurrence: only h @ W_hh + add + tanh on the serial path.
    h_ref[...] = jnp.zeros_like(h_ref)

    def step(t, carry):
        h = h_ref[...]
        pre = xp_ref[t] + jnp.dot(h, whh_ref[...],
                                  preferred_element_type=jnp.float32)
        h_ref[...] = jnp.tanh(pre)
        return carry

    jax.lax.fori_loop(0, seq_len, step, 0, unroll=True)

    # --- Final Linear on the last hidden state.
    out_ref[...] = (jnp.dot(h_ref[...], wfc_ref[...],
                            preferred_element_type=jnp.float32)
                    + bfc_ref[...])


def rnn_forward(text, emb_table, w_ih, w_hh, b_ih, b_hh, w_fc, b_fc):
    """text: (seq_len, batch) int32.  Returns (batch, output_dim) float32."""
    seq_len, batch = text.shape
    emb_dim = emb_table.shape[1]
    hidden_dim = w_ih.shape[0]
    output_dim = w_fc.shape[0]

    # Lane/sublane-aligned padded sizes (zero padding keeps real lanes exact).
    B = _round_up(batch, 8)
    E = _round_up(emb_dim, 128)
    H = _round_up(hidden_dim, 128)
    O = _round_up(output_dim, 128)

    # Embedding lookup (gather) — glue, outside the kernel.
    embedded = jnp.take(emb_table, text, axis=0)               # (S, batch, emb)

    f32 = jnp.float32
    x = jnp.zeros((seq_len, B, E), f32).at[:, :batch, :emb_dim].set(
        embedded.astype(f32))

    wih_t = jnp.zeros((E, H), f32).at[:emb_dim, :hidden_dim].set(w_ih.T)
    whh_t = jnp.zeros((H, H), f32).at[:hidden_dim, :hidden_dim].set(w_hh.T)
    wfc_t = jnp.zeros((H, O), f32).at[:hidden_dim, :output_dim].set(w_fc.T)
    bias = jnp.zeros((1, H), f32).at[0, :hidden_dim].set(b_ih + b_hh)  # fused
    bfc = jnp.zeros((1, O), f32).at[0, :output_dim].set(b_fc)

    out = pl.pallas_call(
        rnn_kernel,
        out_shape=jax.ShapeDtypeStruct((B, O), jnp.float32),
        grid_spec=pltpu.PrefetchScalarGridSpec(
            num_scalar_prefetch=0,
            grid=(1,),
            in_specs=[
                pl.BlockSpec((seq_len, B, E), lambda i: (0, 0, 0)),
                pl.BlockSpec((E, H), lambda i: (0, 0)),
                pl.BlockSpec((H, H), lambda i: (0, 0)),
                pl.BlockSpec((1, H), lambda i: (0, 0)),
                pl.BlockSpec((H, O), lambda i: (0, 0)),
                pl.BlockSpec((1, O), lambda i: (0, 0)),
            ],
            out_specs=pl.BlockSpec((B, O), lambda i: (0, 0)),
            scratch_shapes=[
                pltpu.VMEM((seq_len, B, H), jnp.float32),   # precomputed x-proj
                pltpu.VMEM((B, H), jnp.float32),            # hidden state
            ],
        ),
        compiler_params=pltpu.CompilerParams(
            dimension_semantics=("arbitrary",)),
    )(x, wih_t, whh_t, bias, wfc_t, bfc)

    return out[:batch, :output_dim]


def reference_forward(text, emb_table, w_ih, w_hh, b_ih, b_hh, w_fc, b_fc):
    embedded = jnp.take(emb_table, text, axis=0)  # (seq, batch, emb)
    batch = text.shape[1]
    h = jnp.zeros((batch, w_ih.shape[0]), jnp.float32)

    def step(h, x_t):
        h = jnp.tanh(x_t @ w_ih.T + b_ih + h @ w_hh.T + b_hh)
        return h, None

    h, _ = jax.lax.scan(step, h, embedded)
    return h @ w_fc.T + b_fc


if __name__ == "__main__":
    # Small, deterministic shapes consistent with the module's forward.
    input_dim = 100      # vocab size
    embedding_dim = 32
    hidden_dim = 32
    output_dim = 8
    seq_len = 8
    batch = 2

    key = jax.random.PRNGKey(0)
    k_emb, k_wih, k_whh, k_bih, k_bhh, k_wfc, k_bfc, k_txt = jax.random.split(key, 8)

    emb_table = jax.random.normal(k_emb, (input_dim, embedding_dim), jnp.float32) * 0.1
    w_ih = jax.random.normal(k_wih, (hidden_dim, embedding_dim), jnp.float32) * 0.1
    w_hh = jax.random.normal(k_whh, (hidden_dim, hidden_dim), jnp.float32) * 0.1
    b_ih = jax.random.normal(k_bih, (hidden_dim,), jnp.float32) * 0.1
    b_hh = jax.random.normal(k_bhh, (hidden_dim,), jnp.float32) * 0.1
    w_fc = jax.random.normal(k_wfc, (output_dim, hidden_dim), jnp.float32) * 0.1
    b_fc = jax.random.normal(k_bfc, (output_dim,), jnp.float32) * 0.1

    text = jax.random.randint(k_txt, (seq_len, batch), 0, input_dim, jnp.int32)

    out = rnn_forward(text, emb_table, w_ih, w_hh, b_ih, b_hh, w_fc, b_fc)
    out = jax.block_until_ready(out)

    ref = reference_forward(text, emb_table, w_ih, w_hh, b_ih, b_hh, w_fc, b_fc)
    assert out.shape == (batch, output_dim)
    assert jnp.allclose(out, ref, atol=1e-5, rtol=1e-5)

    print("KERNEL_OK")
</pallas_src>

<mosaic_0001>
module attributes {stable_mosaic.version = 11 : i64} {
  func.func @rnn_kernel(%arg0: i32, %arg1: memref<8x8x128xf32, #tpu.memory_space<vmem>>, %arg2: memref<128x128xf32, #tpu.memory_space<vmem>>, %arg3: memref<128x128xf32, #tpu.memory_space<vmem>>, %arg4: memref<1x128xf32, #tpu.memory_space<vmem>>, %arg5: memref<128x128xf32, #tpu.memory_space<vmem>>, %arg6: memref<1x128xf32, #tpu.memory_space<vmem>>, %arg7: memref<8x128xf32, #tpu.memory_space<vmem>>, %arg8: memref<8x8x128xf32, #tpu.memory_space<vmem>>, %arg9: memref<8x128xf32, #tpu.memory_space<vmem>>) attributes {dimension_semantics = [#tpu.dimension_semantics<arbitrary>], iteration_bounds = array<i64: 1>, scalar_prefetch = 0 : i64, scratch_operands = 2 : i64, tpu.core_type = #tpu.core_type<tc>, window_params = [{pipeline_mode = #tpu.pipeline_mode<synchronous>, transform_indices = @transform_0, window_bounds = array<i64: 8, 8, 128>}, {pipeline_mode = #tpu.pipeline_mode<synchronous>, transform_indices = @transform_1, window_bounds = array<i64: 128, 128>}, {pipeline_mode = #tpu.pipeline_mode<synchronous>, transform_indices = @transform_2, window_bounds = array<i64: 128, 128>}, {pipeline_mode = #tpu.pipeline_mode<synchronous>, transform_indices = @transform_3, window_bounds = array<i64: 1, 128>}, {pipeline_mode = #tpu.pipeline_mode<synchronous>, transform_indices = @transform_4, window_bounds = array<i64: 128, 128>}, {pipeline_mode = #tpu.pipeline_mode<synchronous>, transform_indices = @transform_5, window_bounds = array<i64: 1, 128>}, {pipeline_mode = #tpu.pipeline_mode<synchronous>, transform_indices = @transform_6, window_bounds = array<i64: 8, 128>}]} {
    %c0 = arith.constant 0 : index
    %c0_0 = arith.constant 0 : index
    %c0_1 = arith.constant 0 : index
    %0 = vector.load %arg1[%c0, %c0_0, %c0_1] : memref<8x8x128xf32, #tpu.memory_space<vmem>>, vector<8x8x128xf32>
    %1 = vector.shape_cast %0 : vector<8x8x128xf32> to vector<64x128xf32>
    %c0_2 = arith.constant 0 : index
    %c0_3 = arith.constant 0 : index
    %2 = vector.load %arg2[%c0_2, %c0_3] : memref<128x128xf32, #tpu.memory_space<vmem>>, vector<128x128xf32>
    %cst = arith.constant dense<0.000000e+00> : vector<64x128xf32>
    %3 = tpu.matmul %1, %2, %cst {dimension_numbers = #tpu.dot_dimension_numbers<[1], [0], [0], [1], [0, 0, 1, 1], [], []>} : vector<64x128xf32>, vector<128x128xf32>, vector<64x128xf32> -> vector<64x128xf32>
    %c0_4 = arith.constant 0 : index
    %c0_5 = arith.constant 0 : index
    %4 = vector.load %arg4[%c0_4, %c0_5] : memref<1x128xf32, #tpu.memory_space<vmem>>, vector<1x128xf32>
    %5 = vector.broadcast %4 : vector<1x128xf32> to vector<64x128xf32>
    %6 = arith.addf %3, %5 : vector<64x128xf32>
    %7 = vector.shape_cast %6 : vector<64x128xf32> to vector<8x8x128xf32>
    %c0_6 = arith.constant 0 : index
    %c0_7 = arith.constant 0 : index
    %c0_8 = arith.constant 0 : index
    %8 = vector.load %arg8[%c0_6, %c0_7, %c0_8] : memref<8x8x128xf32, #tpu.memory_space<vmem>>, vector<8x8x128xf32>
    tpu.vector_store %arg8[%c0_6, %c0_7, %c0_8], %7 {strides = array<i32>} : memref<8x8x128xf32, #tpu.memory_space<vmem>>, vector<8x8x128xf32>,
    %cst_9 = arith.constant 0.000000e+00 : f32
    %9 = vector.broadcast %cst_9 : f32 to vector<8x128xf32>
    %c0_10 = arith.constant 0 : index
    %c0_11 = arith.constant 0 : index
    %10 = vector.load %arg9[%c0_10, %c0_11] : memref<8x128xf32, #tpu.memory_space<vmem>>, vector<8x128xf32>
    tpu.vector_store %arg9[%c0_10, %c0_11], %9 {strides = array<i32>} : memref<8x128xf32, #tpu.memory_space<vmem>>, vector<8x128xf32>,
    %c0_i32 = arith.constant 0 : i32
    %c0_12 = arith.constant 0 : index
    %c0_13 = arith.constant 0 : index
    %11 = vector.load %arg9[%c0_12, %c0_13] : memref<8x128xf32, #tpu.memory_space<vmem>>, vector<8x128xf32>
    %12 = arith.index_cast %c0_i32 : i32 to index
    %c0_14 = arith.constant 0 : index
    %c0_15 = arith.constant 0 : index
    %13 = vector.load %arg8[%12, %c0_14, %c0_15] : memref<8x8x128xf32, #tpu.memory_space<vmem>>, vector<1x8x128xf32>
    %14 = vector.shape_cast %13 : vector<1x8x128xf32> to vector<8x128xf32>
    %c0_16 = arith.constant 0 : index
    %c0_17 = arith.constant 0 : index
    %15 = vector.load %arg3[%c0_16, %c0_17] : memref<128x128xf32, #tpu.memory_space<vmem>>, vector<128x128xf32>
    %cst_18 = arith.constant dense<0.000000e+00> : vector<8x128xf32>
    %16 = tpu.matmul %11, %15, %cst_18 {dimension_numbers = #tpu.dot_dimension_numbers<[1], [0], [0], [1], [0, 0, 1, 1], [], []>} : vector<8x128xf32>, vector<128x128xf32>, vector<8x128xf32> -> vector<8x128xf32>
    %17 = arith.addf %14, %16 : vector<8x128xf32>
    %18 = math.tanh %17 : vector<8x128xf32>
    %c0_19 = arith.constant 0 : index
    %c0_20 = arith.constant 0 : index
    %19 = vector.load %arg9[%c0_19, %c0_20] : memref<8x128xf32, #tpu.memory_space<vmem>>, vector<8x128xf32>
    tpu.vector_store %arg9[%c0_19, %c0_20], %18 {strides = array<i32>} : memref<8x128xf32, #tpu.memory_space<vmem>>, vector<8x128xf32>,
    %c1_i32 = arith.constant 1 : i32
    %c0_21 = arith.constant 0 : index
    %c0_22 = arith.constant 0 : index
    %20 = vector.load %arg9[%c0_21, %c0_22] : memref<8x128xf32, #tpu.memory_space<vmem>>, vector<8x128xf32>
    %21 = arith.index_cast %c1_i32 : i32 to index
    %c0_23 = arith.constant 0 : index
    %c0_24 = arith.constant 0 : index
    %22 = vector.load %arg8[%21, %c0_23, %c0_24] : memref<8x8x128xf32, #tpu.memory_space<vmem>>, vector<1x8x128xf32>
    %23 = vector.shape_cast %22 : vector<1x8x128xf32> to vector<8x128xf32>
    %c0_25 = arith.constant 0 : index
    %c0_26 = arith.constant 0 : index
    %24 = vector.load %arg3[%c0_25, %c0_26] : memref<128x128xf32, #tpu.memory_space<vmem>>, vector<128x128xf32>
    %cst_27 = arith.constant dense<0.000000e+00> : vector<8x128xf32>
    %25 = tpu.matmul %20, %24, %cst_27 {dimension_numbers = #tpu.dot_dimension_numbers<[1], [0], [0], [1], [0, 0, 1, 1], [], []>} : vector<8x128xf32>, vector<128x128xf32>, vector<8x128xf32> -> vector<8x128xf32>
    %26 = arith.addf %23, %25 : vector<8x128xf32>
    %27 = math.tanh %26 : vector<8x128xf32>
    %c0_28 = arith.constant 0 : index
    %c0_29 = arith.constant 0 : index
    %28 = vector.load %arg9[%c0_28, %c0_29] : memref<8x128xf32, #tpu.memory_space<vmem>>, vector<8x128xf32>
    tpu.vector_store %arg9[%c0_28, %c0_29], %27 {strides = array<i32>} : memref<8x128xf32, #tpu.memory_space<vmem>>, vector<8x128xf32>,
    %c2_i32 = arith.constant 2 : i32
    %c0_30 = arith.constant 0 : index
    %c0_31 = arith.constant 0 : index
    %29 = vector.load %arg9[%c0_30, %c0_31] : memref<8x128xf32, #tpu.memory_space<vmem>>, vector<8x128xf32>
    %30 = arith.index_cast %c2_i32 : i32 to index
    %c0_32 = arith.constant 0 : index
    %c0_33 = arith.constant 0 : index
    %31 = vector.load %arg8[%30, %c0_32, %c0_33] : memref<8x8x128xf32, #tpu.memory_space<vmem>>, vector<1x8x128xf32>
    %32 = vector.shape_cast %31 : vector<1x8x128xf32> to vector<8x128xf32>
    %c0_34 = arith.constant 0 : index
    %c0_35 = arith.constant 0 : index
    %33 = vector.load %arg3[%c0_34, %c0_35] : memref<128x128xf32, #tpu.memory_space<vmem>>, vector<128x128xf32>
    %cst_36 = arith.constant dense<0.000000e+00> : vector<8x128xf32>
    %34 = tpu.matmul %29, %33, %cst_36 {dimension_numbers = #tpu.dot_dimension_numbers<[1], [0], [0], [1], [0, 0, 1, 1], [], []>} : vector<8x128xf32>, vector<128x128xf32>, vector<8x128xf32> -> vector<8x128xf32>
    %35 = arith.addf %32, %34 : vector<8x128xf32>
    %36 = math.tanh %35 : vector<8x128xf32>
    %c0_37 = arith.constant 0 : index
    %c0_38 = arith.constant 0 : index
    %37 = vector.load %arg9[%c0_37, %c0_38] : memref<8x128xf32, #tpu.memory_space<vmem>>, vector<8x128xf32>
    tpu.vector_store %arg9[%c0_37, %c0_38], %36 {strides = array<i32>} : memref<8x128xf32, #tpu.memory_space<vmem>>, vector<8x128xf32>,
    %c3_i32 = arith.constant 3 : i32
    %c0_39 = arith.constant 0 : index
    %c0_40 = arith.constant 0 : index
    %38 = vector.load %arg9[%c0_39, %c0_40] : memref<8x128xf32, #tpu.memory_space<vmem>>, vector<8x128xf32>
    %39 = arith.index_cast %c3_i32 : i32 to index
    %c0_41 = arith.constant 0 : index
    %c0_42 = arith.constant 0 : index
    %40 = vector.load %arg8[%39, %c0_41, %c0_42] : memref<8x8x128xf32, #tpu.memory_space<vmem>>, vector<1x8x128xf32>
    %41 = vector.shape_cast %40 : vector<1x8x128xf32> to vector<8x128xf32>
    %c0_43 = arith.constant 0 : index
    %c0_44 = arith.constant 0 : index
    %42 = vector.load %arg3[%c0_43, %c0_44] : memref<128x128xf32, #tpu.memory_space<vmem>>, vector<128x128xf32>
    %cst_45 = arith.constant dense<0.000000e+00> : vector<8x128xf32>
    %43 = tpu.matmul %38, %42, %cst_45 {dimension_numbers = #tpu.dot_dimension_numbers<[1], [0], [0], [1], [0, 0, 1, 1], [], []>} : vector<8x128xf32>, vector<128x128xf32>, vector<8x128xf32> -> vector<8x128xf32>
    %44 = arith.addf %41, %43 : vector<8x128xf32>
    %45 = math.tanh %44 : vector<8x128xf32>
    %c0_46 = arith.constant 0 : index
    %c0_47 = arith.constant 0 : index
    %46 = vector.load %arg9[%c0_46, %c0_47] : memref<8x128xf32, #tpu.memory_space<vmem>>, vector<8x128xf32>
    tpu.vector_store %arg9[%c0_46, %c0_47], %45 {strides = array<i32>} : memref<8x128xf32, #tpu.memory_space<vmem>>, vector<8x128xf32>,
    %c4_i32 = arith.constant 4 : i32
    %c0_48 = arith.constant 0 : index
    %c0_49 = arith.constant 0 : index
    %47 = vector.load %arg9[%c0_48, %c0_49] : memref<8x128xf32, #tpu.memory_space<vmem>>, vector<8x128xf32>
    %48 = arith.index_cast %c4_i32 : i32 to index
    %c0_50 = arith.constant 0 : index
    %c0_51 = arith.constant 0 : index
    %49 = vector.load %arg8[%48, %c0_50, %c0_51] : memref<8x8x128xf32, #tpu.memory_space<vmem>>, vector<1x8x128xf32>
    %50 = vector.shape_cast %49 : vector<1x8x128xf32> to vector<8x128xf32>
    %c0_52 = arith.constant 0 : index
    %c0_53 = arith.constant 0 : index
    %51 = vector.load %arg3[%c0_52, %c0_53] : memref<128x128xf32, #tpu.memory_space<vmem>>, vector<128x128xf32>
    %cst_54 = arith.constant dense<0.000000e+00> : vector<8x128xf32>
    %52 = tpu.matmul %47, %51, %cst_54 {dimension_numbers = #tpu.dot_dimension_numbers<[1], [0], [0], [1], [0, 0, 1, 1], [], []>} : vector<8x128xf32>, vector<128x128xf32>, vector<8x128xf32> -> vector<8x128xf32>
    %53 = arith.addf %50, %52 : vector<8x128xf32>
    %54 = math.tanh %53 : vector<8x128xf32>
    %c0_55 = arith.constant 0 : index
    %c0_56 = arith.constant 0 : index
    %55 = vector.load %arg9[%c0_55, %c0_56] : memref<8x128xf32, #tpu.memory_space<vmem>>, vector<8x128xf32>
    tpu.vector_store %arg9[%c0_55, %c0_56], %54 {strides = array<i32>} : memref<8x128xf32, #tpu.memory_space<vmem>>, vector<8x128xf32>,
    %c5_i32 = arith.constant 5 : i32
    %c0_57 = arith.constant 0 : index
    %c0_58 = arith.constant 0 : index
    %56 = vector.load %arg9[%c0_57, %c0_58] : memref<8x128xf32, #tpu.memory_space<vmem>>, vector<8x128xf32>
    %57 = arith.index_cast %c5_i32 : i32 to index
    %c0_59 = arith.constant 0 : index
    %c0_60 = arith.constant 0 : index
    %58 = vector.load %arg8[%57, %c0_59, %c0_60] : memref<8x8x128xf32, #tpu.memory_space<vmem>>, vector<1x8x128xf32>
    %59 = vector.shape_cast %58 : vector<1x8x128xf32> to vector<8x128xf32>
    %c0_61 = arith.constant 0 : index
    %c0_62 = arith.constant 0 : index
    %60 = vector.load %arg3[%c0_61, %c0_62] : memref<128x128xf32, #tpu.memory_space<vmem>>, vector<128x128xf32>
    %cst_63 = arith.constant dense<0.000000e+00> : vector<8x128xf32>
    %61 = tpu.matmul %56, %60, %cst_63 {dimension_numbers = #tpu.dot_dimension_numbers<[1], [0], [0], [1], [0, 0, 1, 1], [], []>} : vector<8x128xf32>, vector<128x128xf32>, vector<8x128xf32> -> vector<8x128xf32>
    %62 = arith.addf %59, %61 : vector<8x128xf32>
    %63 = math.tanh %62 : vector<8x128xf32>
    %c0_64 = arith.constant 0 : index
    %c0_65 = arith.constant 0 : index
    %64 = vector.load %arg9[%c0_64, %c0_65] : memref<8x128xf32, #tpu.memory_space<vmem>>, vector<8x128xf32>
    tpu.vector_store %arg9[%c0_64, %c0_65], %63 {strides = array<i32>} : memref<8x128xf32, #tpu.memory_space<vmem>>, vector<8x128xf32>,
    %c6_i32 = arith.constant 6 : i32
    %c0_66 = arith.constant 0 : index
    %c0_67 = arith.constant 0 : index
    %65 = vector.load %arg9[%c0_66, %c0_67] : memref<8x128xf32, #tpu.memory_space<vmem>>, vector<8x128xf32>
    %66 = arith.index_cast %c6_i32 : i32 to index
    %c0_68 = arith.constant 0 : index
    %c0_69 = arith.constant 0 : index
    %67 = vector.load %arg8[%66, %c0_68, %c0_69] : memref<8x8x128xf32, #tpu.memory_space<vmem>>, vector<1x8x128xf32>
    %68 = vector.shape_cast %67 : vector<1x8x128xf32> to vector<8x128xf32>
    %c0_70 = arith.constant 0 : index
    %c0_71 = arith.constant 0 : index
    %69 = vector.load %arg3[%c0_70, %c0_71] : memref<128x128xf32, #tpu.memory_space<vmem>>, vector<128x128xf32>
    %cst_72 = arith.constant dense<0.000000e+00> : vector<8x128xf32>
    %70 = tpu.matmul %65, %69, %cst_72 {dimension_numbers = #tpu.dot_dimension_numbers<[1], [0], [0], [1], [0, 0, 1, 1], [], []>} : vector<8x128xf32>, vector<128x128xf32>, vector<8x128xf32> -> vector<8x128xf32>
    %71 = arith.addf %68, %70 : vector<8x128xf32>
    %72 = math.tanh %71 : vector<8x128xf32>
    %c0_73 = arith.constant 0 : index
    %c0_74 = arith.constant 0 : index
    %73 = vector.load %arg9[%c0_73, %c0_74] : memref<8x128xf32, #tpu.memory_space<vmem>>, vector<8x128xf32>
    tpu.vector_store %arg9[%c0_73, %c0_74], %72 {strides = array<i32>} : memref<8x128xf32, #tpu.memory_space<vmem>>, vector<8x128xf32>,
    %c7_i32 = arith.constant 7 : i32
    %c0_75 = arith.constant 0 : index
    %c0_76 = arith.constant 0 : index
    %74 = vector.load %arg9[%c0_75, %c0_76] : memref<8x128xf32, #tpu.memory_space<vmem>>, vector<8x128xf32>
    %75 = arith.index_cast %c7_i32 : i32 to index
    %c0_77 = arith.constant 0 : index
    %c0_78 = arith.constant 0 : index
    %76 = vector.load %arg8[%75, %c0_77, %c0_78] : memref<8x8x128xf32, #tpu.memory_space<vmem>>, vector<1x8x128xf32>
    %77 = vector.shape_cast %76 : vector<1x8x128xf32> to vector<8x128xf32>
    %c0_79 = arith.constant 0 : index
    %c0_80 = arith.constant 0 : index
    %78 = vector.load %arg3[%c0_79, %c0_80] : memref<128x128xf32, #tpu.memory_space<vmem>>, vector<128x128xf32>
    %cst_81 = arith.constant dense<0.000000e+00> : vector<8x128xf32>
    %79 = tpu.matmul %74, %78, %cst_81 {dimension_numbers = #tpu.dot_dimension_numbers<[1], [0], [0], [1], [0, 0, 1, 1], [], []>} : vector<8x128xf32>, vector<128x128xf32>, vector<8x128xf32> -> vector<8x128xf32>
    %80 = arith.addf %77, %79 : vector<8x128xf32>
    %81 = math.tanh %80 : vector<8x128xf32>
    %c0_82 = arith.constant 0 : index
    %c0_83 = arith.constant 0 : index
    %82 = vector.load %arg9[%c0_82, %c0_83] : memref<8x128xf32, #tpu.memory_space<vmem>>, vector<8x128xf32>
    tpu.vector_store %arg9[%c0_82, %c0_83], %81 {strides = array<i32>} : memref<8x128xf32, #tpu.memory_space<vmem>>, vector<8x128xf32>,
    %c8_i32 = arith.constant 8 : i32
    %c0_84 = arith.constant 0 : index
    %c0_85 = arith.constant 0 : index
    %83 = vector.load %arg9[%c0_84, %c0_85] : memref<8x128xf32, #tpu.memory_space<vmem>>, vector<8x128xf32>
    %c0_86 = arith.constant 0 : index
    %c0_87 = arith.constant 0 : index
    %84 = vector.load %arg5[%c0_86, %c0_87] : memref<128x128xf32, #tpu.memory_space<vmem>>, vector<128x128xf32>
    %cst_88 = arith.constant dense<0.000000e+00> : vector<8x128xf32>
    %85 = tpu.matmul %83, %84, %cst_88 {dimension_numbers = #tpu.dot_dimension_numbers<[1], [0], [0], [1], [0, 0, 1, 1], [], []>} : vector<8x128xf32>, vector<128x128xf32>, vector<8x128xf32> -> vector<8x128xf32>
    %c0_89 = arith.constant 0 : index
    %c0_90 = arith.constant 0 : index
    %86 = vector.load %arg6[%c0_89, %c0_90] : memref<1x128xf32, #tpu.memory_space<vmem>>, vector<1x128xf32>
    %87 = vector.broadcast %86 : vector<1x128xf32> to vector<8x128xf32>
    %88 = arith.addf %85, %87 : vector<8x128xf32>
    %c0_91 = arith.constant 0 : index
    %c0_92 = arith.constant 0 : index
    %89 = vector.load %arg7[%c0_91, %c0_92] : memref<8x128xf32, #tpu.memory_space<vmem>>, vector<8x128xf32>
    tpu.vector_store %arg7[%c0_91, %c0_92], %88 {strides = array<i32>} : memref<8x128xf32, #tpu.memory_space<vmem>>, vector<8x128xf32>,
    return
  }
  func.func @transform_0(%arg0: i32) -> (i32, i32, i32) {
    %c0_i32 = arith.constant 0 : i32
    %c0_i32_0 = arith.constant 0 : i32
    %c0_i32_1 = arith.constant 0 : i32
    %c0_i32_2 = arith.constant 0 : i32
    return %c0_i32, %c0_i32_0, %c0_i32_1 : i32, i32, i32
  }
  func.func @transform_1(%arg0: i32) -> (i32, i32) {
    %c0_i32 = arith.constant 0 : i32
    %c0_i32_0 = arith.constant 0 : i32
    %c0_i32_1 = arith.constant 0 : i32
    return %c0_i32, %c0_i32_0 : i32, i32
  }
  func.func @transform_2(%arg0: i32) -> (i32, i32) {
    %c0_i32 = arith.constant 0 : i32
    %c0_i32_0 = arith.constant 0 : i32
    %c0_i32_1 = arith.constant 0 : i32
    return %c0_i32, %c0_i32_0 : i32, i32
  }
  func.func @transform_3(%arg0: i32) -> (i32, i32) {
    %c0_i32 = arith.constant 0 : i32
    %c0_i32_0 = arith.constant 0 : i32
    %c0_i32_1 = arith.constant 0 : i32
    return %c0_i32, %c0_i32_0 : i32, i32
  }
  func.func @transform_4(%arg0: i32) -> (i32, i32) {
    %c0_i32 = arith.constant 0 : i32
    %c0_i32_0 = arith.constant 0 : i32
    %c0_i32_1 = arith.constant 0 : i32
    return %c0_i32, %c0_i32_0 : i32, i32
  }
  func.func @transform_5(%arg0: i32) -> (i32, i32) {
    %c0_i32 = arith.constant 0 : i32
    %c0_i32_0 = arith.constant 0 : i32
    %c0_i32_1 = arith.constant 0 : i32
    return %c0_i32, %c0_i32_0 : i32, i32
  }
  func.func @transform_6(%arg0: i32) -> (i32, i32) {
    %c0_i32 = arith.constant 0 : i32
    %c0_i32_0 = arith.constant 0 : i32
    %c0_i32_1 = arith.constant 0 : i32
    return %c0_i32, %c0_i32_0 : i32, i32
  }
}

</mosaic_0001>

<llo_original>
// kernel: tpu_custom_call.1
$region0: #{tpu_custom_call.1}
  #allocation0 [shape = 'u32[]', space=smem, size = 0x4, offset = 0x4, fixed_abs, tag = 'smem constant byte address 0x4 - core index']
  #allocation1 [shape = 'u32[144,128]{1,0:T(1,128)}', space=vmem, size = 0x12000, scoped, tag = 'internal scratch']
  #allocation2 [shape = 'f32[8,8,128]{2,1,0:T(8,128)}', space=vmem, size = 0x8000, scoped, tag = 'scratch operand']
  #allocation3 [shape = 'f32[8,128]{1,0:T(8,128)}', space=vmem, size = 0x1000, scoped, tag = 'scratch operand']
  %s0 = inlined_call_operand.hbm [shape: f32[8,8,128], index: 0, kind: input, shape index: {}]
  %s1 = inlined_call_operand.hbm [shape: f32[128,128], index: 1, kind: input, shape index: {}]
  %s2 = inlined_call_operand.hbm [shape: f32[128,128], index: 2, kind: input, shape index: {}]
  %s3 = inlined_call_operand.vmem [shape: f32[1,128], index: 3, kind: input, shape index: {}]
  %s4 = inlined_call_operand.hbm [shape: f32[128,128], index: 4, kind: input, shape index: {}]
  %s5 = inlined_call_operand.vmem [shape: f32[1,128], index: 5, kind: input, shape index: {}]
  %s6 = inlined_call_operand.hbm [shape: f32[8,128], index: 6, kind: output, shape index: {}]
  %s7 = sld [smem:[#allocation0]]
  $region50: #{tpu_custom_call.1} parent=0
    _
  %s9 = ssub.s32 1, %s7
  %s10 = scalar_select 0, %s9, %s7
  $region1: #{tpu_custom_call.1} parent=0
    #allocation4 [shape = 'u8[32768]{0}', space=vmem, size = 0x8000, scoped, tag = 'input window, operand 0, single buffered']
    #allocation5 [shape = 's32[1]{0}', space=sflag, size = 0x4, scoped, tag = 'scoped memory for tpu_custom_call.1']
    #allocation6 [shape = 's32[1]{0}', space=sflag, size = 0x4, scoped, tag = 'scoped memory for tpu_custom_call.1']
    #allocation7 [shape = 'u8[65536]{0}', space=vmem, size = 0x10000, scoped, tag = 'input window, operand 1, single buffered']
    #allocation8 [shape = 's32[1]{0}', space=sflag, size = 0x4, scoped, tag = 'scoped memory for tpu_custom_call.1']
    #allocation9 [shape = 'u8[65536]{0}', space=vmem, size = 0x10000, scoped, tag = 'input window, operand 2, single buffered']
    #allocation10 [shape = 'u8[65536]{0}', space=vmem, size = 0x10000, scoped, tag = 'input window, operand 4, single buffered']
    #allocation11 [shape = 's32[1]{0}', space=sflag, size = 0x4, scoped, tag = 'scoped memory for tpu_custom_call.1']
    #allocation12 [shape = 'u8[4096]{0}', space=vmem, size = 0x1000, scoped, tag = 'output window, operand 0, single buffered']
    %11 = vsyncpa [#allocation5], 0
    %12 = vsyncpa [#allocation8], 0
    %13 = vsyncpa [#allocation11], 0
    %14 = vsyncpa [#allocation6], 0
    // Predicated region
    $region2: #{tpu_custom_call.1} parent=1 // pred_check
      _
    $region3: #{tpu_custom_call.1} parent=1 // pred_check_branch
      %16 = sbr.rel (0) target = $region5
    $region4: #{tpu_custom_call.1} parent=1 // pred_region
      %s18 = ssub.s32 1024, 1024
      %19 = vsyncadd [#allocation5], %s18
      %s20 = sshll.u32 [#allocation4], 4
      %s21 = int_to_ptr.vmem [resolvable:$true] %s20
      %26 = dma.hbm_to_vmem [thread:$0]  %s0, 1024, %s21, [#allocation5], 128, 128, 8
    $region5: #{tpu_custom_call.1} parent=1 // pred_fallthru
      _
    // Predicated region
    $region6: #{tpu_custom_call.1} parent=1 // pred_check
      _
    $region7: #{tpu_custom_call.1} parent=1 // pred_check_branch
      %28 = sbr.rel (0) target = $region9
    $region8: #{tpu_custom_call.1} parent=1 // pred_region
      %s30 = ssub.s32 2048, 2048
      %31 = vsyncadd [#allocation8], %s30
      %s32 = sshll.u32 [#allocation7], 4
      %s33 = int_to_ptr.vmem [resolvable:$true] %s32
      %38 = dma.hbm_to_vmem [thread:$0]  %s1, 2048, %s33, [#allocation8], 128, 128, 8
    $region9: #{tpu_custom_call.1} parent=1 // pred_fallthru
      _
    // Predicated region
    $region10: #{tpu_custom_call.1} parent=1 // pred_check
      _
    $region11: #{tpu_custom_call.1} parent=1 // pred_check_branch
      %40 = sbr.rel (0) target = $region13
    $region12: #{tpu_custom_call.1} parent=1 // pred_region
      %s42 = ssub.s32 2048, 2048
      %43 = vsyncadd [#allocation8], %s42
      %s44 = sshll.u32 [#allocation9], 4
      %s45 = int_to_ptr.vmem [resolvable:$true] %s44
      %50 = dma.hbm_to_vmem [thread:$0]  %s2, 2048, %s45, [#allocation8], 128, 128, 8
    $region13: #{tpu_custom_call.1} parent=1 // pred_fallthru
      _
    // Predicated region
    $region14: #{tpu_custom_call.1} parent=1 // pred_check
      _
    $region15: #{tpu_custom_call.1} parent=1 // pred_check_branch
      %52 = sbr.rel (0) target = $region17
    $region16: #{tpu_custom_call.1} parent=1 // pred_region
      _
    $region17: #{tpu_custom_call.1} parent=1 // pred_fallthru
      _
    // Predicated region
    $region18: #{tpu_custom_call.1} parent=1 // pred_check
      _
    $region19: #{tpu_custom_call.1} parent=1 // pred_check_branch
      %54 = sbr.rel (0) target = $region21
    $region20: #{tpu_custom_call.1} parent=1 // pred_region
      %s56 = ssub.s32 2048, 2048
      %57 = vsyncadd [#allocation11], %s56
      %s58 = sshll.u32 [#allocation10], 4
      %s59 = int_to_ptr.vmem [resolvable:$true] %s58
      %64 = dma.hbm_to_vmem [thread:$0]  %s4, 2048, %s59, [#allocation11], 128, 128, 8
    $region21: #{tpu_custom_call.1} parent=1 // pred_fallthru
      _
    // Predicated region
    $region22: #{tpu_custom_call.1} parent=1 // pred_check
      _
    $region23: #{tpu_custom_call.1} parent=1 // pred_check_branch
      %66 = sbr.rel (0) target = $region25
    $region24: #{tpu_custom_call.1} parent=1 // pred_region
      _
    $region25: #{tpu_custom_call.1} parent=1 // pred_fallthru
      _
    // Predicated region
    $region26: #{tpu_custom_call.1} parent=1 // pred_check
      _
    $region27: #{tpu_custom_call.1} parent=1 // pred_check_branch
      %68 = sbr.rel (0) target = $region29
    $region28: #{tpu_custom_call.1} parent=1 // pred_region
      %69 = dma.done [#allocation5], 1024
    $region29: #{tpu_custom_call.1} parent=1 // pred_fallthru
      _
    // Predicated region
    $region30: #{tpu_custom_call.1} parent=1 // pred_check
      _
    $region31: #{tpu_custom_call.1} parent=1 // pred_check_branch
      %71 = sbr.rel (0) target = $region33
    $region32: #{tpu_custom_call.1} parent=1 // pred_region
      %72 = dma.done [#allocation8], 2048
    $region33: #{tpu_custom_call.1} parent=1 // pred_fallthru
      _
    // Predicated region
    $region34: #{tpu_custom_call.1} parent=1 // pred_check
      _
    $region35: #{tpu_custom_call.1} parent=1 // pred_check_branch
      %74 = sbr.rel (0) target = $region37
    $region36: #{tpu_custom_call.1} parent=1 // pred_region
      %75 = dma.done [#allocation8], 2048
    $region37: #{tpu_custom_call.1} parent=1 // pred_fallthru
      _
    // Predicated region
    $region38: #{tpu_custom_call.1} parent=1 // pred_check
      _
    $region39: #{tpu_custom_call.1} parent=1 // pred_check_branch
      %77 = sbr.rel (0) target = $region41
    $region40: #{tpu_custom_call.1} parent=1 // pred_region
      %78 = dma.done [#allocation11], 2048
    $region41: #{tpu_custom_call.1} parent=1 // pred_fallthru
      _
    %v79 = vld [vmem:[#allocation4] sm:$0xff]
    %v80 = vld [vmem:[#allocation4 + $0x8] sm:$0xff]
    %v81 = vld [vmem:[#allocation4 + $0x10] sm:$0xff]
    %v82 = vld [vmem:[#allocation4 + $0x18] sm:$0xff]
    %v83 = vld [vmem:[#allocation4 + $0x20] sm:$0xff]
    %v84 = vld [vmem:[#allocation4 + $0x28] sm:$0xff]
    %v85 = vld [vmem:[#allocation4 + $0x30] sm:$0xff]
    %v86 = vld [vmem:[#allocation4 + $0x38] sm:$0xff]
    %v87 = vld [vmem:[#allocation7] sm:$0xff]
    %v88 = vld [vmem:[#allocation7 + $0x8] sm:$0xff]
    %v89 = vld [vmem:[#allocation7 + $0x10] sm:$0xff]
    %v90 = vld [vmem:[#allocation7 + $0x18] sm:$0xff]
    %v91 = vld [vmem:[#allocation7 + $0x20] sm:$0xff]
    %v92 = vld [vmem:[#allocation7 + $0x28] sm:$0xff]
    %v93 = vld [vmem:[#allocation7 + $0x30] sm:$0xff]
    %v94 = vld [vmem:[#allocation7 + $0x38] sm:$0xff]
    %v95 = vld [vmem:[#allocation7 + $0x40] sm:$0xff]
    %v96 = vld [vmem:[#allocation7 + $0x48] sm:$0xff]
    %v97 = vld [vmem:[#allocation7 + $0x50] sm:$0xff]
    %v98 = vld [vmem:[#allocation7 + $0x58] sm:$0xff]
    %v99 = vld [vmem:[#allocation7 + $0x60] sm:$0xff]
    %v100 = vld [vmem:[#allocation7 + $0x68] sm:$0xff]
    %v101 = vld [vmem:[#allocation7 + $0x70] sm:$0xff]
    %v102 = vld [vmem:[#allocation7 + $0x78] sm:$0xff]
    %v103 = vld [vmem:[%s3] sm:$0x1]
    %v105 = vlaneseq
    %v106 = vshrl.u32 %v105, 7
    %v107 = vsub.s32 0, %v106
    %v108 = vrot.slane %v103, %v107
    %110 = vmatprep.subr.mxu0 0.0
    %111 = vmatpush1.msra.mxu0 %v87
    %112 = vmatprep.subr.mxu0 0.0
    %113 = vmatpush1.msra.mxu0 %v88
    %114 = vmatprep.subr.mxu0 0.0
    %115 = vmatpush1.msra.mxu0 %v89
    %116 = vmatprep.subr.mxu0 0.0
    %117 = vmatpush1.msra.mxu0 %v90
    %118 = vmatprep.subr.mxu0 0.0
    %119 = vmatpush1.msra.mxu0 %v91
    %120 = vmatprep.subr.mxu0 0.0
    %121 = vmatpush1.msra.mxu0 %v92
    %122 = vmatprep.subr.mxu0 0.0
    %123 = vmatpush1.msra.mxu0 %v93
    %124 = vmatprep.subr.mxu0 0.0
    %125 = vmatpush1.msra.mxu0 %v94
    %126 = vmatprep.subr.mxu0 0.0
    %127 = vmatpush1.msra.mxu0 %v95
    %128 = vmatprep.subr.mxu0 0.0
    %129 = vmatpush1.msra.mxu0 %v96
    %130 = vmatprep.subr.mxu0 0.0
    %131 = vmatpush1.msra.mxu0 %v97
    %132 = vmatprep.subr.mxu0 0.0
    %133 = vmatpush1.msra.mxu0 %v98
    %134 = vmatprep.subr.mxu0 0.0
    %135 = vmatpush1.msra.mxu0 %v99
    %136 = vmatprep.subr.mxu0 0.0
    %137 = vmatpush1.msra.mxu0 %v100
    %138 = vmatprep.subr.mxu0 0.0
    %139 = vmatpush1.msra.mxu0 %v101
    %140 = vmatprep.subr.mxu0 0.0
    %141 = vmatpush1.msra.mxu0 %v102
    %142 = vmatprep.subr.mxu0 0.0
    %143 = vmatpush1.msra.mxu0 0.0
    %144 = vmatprep.subr.mxu0 0.0
    %145 = vmatpush1.msra.mxu0 0.0
    %146 = vmatprep.subr.mxu0 0.0
    %147 = vmatpush1.msra.mxu0 0.0
    %148 = vmatprep.subr.mxu0 0.0
    %149 = vmatpush1.msra.mxu0 0.0
    %150 = vmatprep.subr.mxu0 0.0
    %151 = vmatpush1.msra.mxu0 0.0
    %152 = vmatprep.subr.mxu0 0.0
    %153 = vmatpush1.msra.mxu0 0.0
    %154 = vmatprep.subr.mxu0 0.0
    %155 = vmatpush1.msra.mxu0 0.0
    %156 = vmatprep.subr.mxu0 0.0
    %157 = vmatpush1.msra.mxu0 0.0
    %158 = vmatprep.subr.mxu0 0.0
    %159 = vmatpush1.msra.mxu0 0.0
    %160 = vmatprep.subr.mxu0 0.0
    %161 = vmatpush1.msra.mxu0 0.0
    %162 = vmatprep.subr.mxu0 0.0
    %163 = vmatpush1.msra.mxu0 0.0
    %164 = vmatprep.subr.mxu0 0.0
    %165 = vmatpush1.msra.mxu0 0.0
    %166 = vmatprep.subr.mxu0 0.0
    %167 = vmatpush1.msra.mxu0 0.0
    %168 = vmatprep.subr.mxu0 0.0
    %169 = vmatpush1.msra.mxu0 0.0
    %170 = vmatprep.subr.mxu0 0.0
    %171 = vmatpush1.msra.mxu0 0.0
    %172 = vmatprep.subr.mxu0 0.0
    %173 = vmatpush1.msra.mxu0 0.0
    %174 = vmatprep.mubr.f32.mxu0 0.0
    %175 = vmatmul.mubr.f32.gmra.mrb[0].mxu0 %v79
    %v176 = vpop.f32.mrb[0].mxu0
    %v177 = vadd.f32 %v108, %v176
    %v178 = vpop.f32.mrb[0].mxu0
    %179 = vmatprep.mubr.f32.mxu0 0.0
    %180 = vmatmul.mubr.f32.gmra.mrb[0].mxu0 %v80
    %v181 = vpop.f32.mrb[0].mxu0
    %v182 = vadd.f32 %v108, %v181
    %v183 = vpop.f32.mrb[0].mxu0
    %184 = vmatprep.mubr.f32.mxu0 0.0
    %185 = vmatmul.mubr.f32.gmra.mrb[0].mxu0 %v81
    %v186 = vpop.f32.mrb[0].mxu0
    %v187 = vadd.f32 %v108, %v186
    %v188 = vpop.f32.mrb[0].mxu0
    %189 = vmatprep.mubr.f32.mxu0 0.0
    %190 = vmatmul.mubr.f32.gmra.mrb[0].mxu0 %v82
    %v191 = vpop.f32.mrb[0].mxu0
    %v192 = vadd.f32 %v108, %v191
    %v193 = vpop.f32.mrb[0].mxu0
    %194 = vmatprep.mubr.f32.mxu0 0.0
    %195 = vmatmul.mubr.f32.gmra.mrb[0].mxu0 %v83
    %v196 = vpop.f32.mrb[0].mxu0
    %v197 = vadd.f32 %v108, %v196
    %v198 = vpop.f32.mrb[0].mxu0
    %199 = vmatprep.mubr.f32.mxu0 0.0
    %200 = vmatmul.mubr.f32.gmra.mrb[0].mxu0 %v84
    %v201 = vpop.f32.mrb[0].mxu0
    %v202 = vadd.f32 %v108, %v201
    %v203 = vpop.f32.mrb[0].mxu0
    %204 = vmatprep.mubr.f32.mxu0 0.0
    %205 = vmatmul.mubr.f32.gmra.mrb[0].mxu0 %v85
    %v206 = vpop.f32.mrb[0].mxu0
    %v207 = vadd.f32 %v108, %v206
    %v208 = vpop.f32.mrb[0].mxu0
    %209 = vmatprep.mubr.f32.mxu0 0.0
    %210 = vmatmul.mubr.f32.gmra.mrb[0].mxu0 %v86
    %v211 = vpop.f32.mrb[0].mxu0
    %v212 = vadd.f32 %v108, %v211
    %v213 = vpop.f32.mrb[0].mxu0
    %214 = vdwg.mxu0
    %215 = vst [vmem:[#allocation2] sm:$0xff] %v177
    %216 = vst [vmem:[#allocation2 + $0x8] sm:$0xff] %v182
    %217 = vst [vmem:[#allocation2 + $0x10] sm:$0xff] %v187
    %218 = vst [vmem:[#allocation2 + $0x18] sm:$0xff] %v192
    %219 = vst [vmem:[#allocation2 + $0x20] sm:$0xff] %v197
    %220 = vst [vmem:[#allocation2 + $0x28] sm:$0xff] %v202
    %221 = vst [vmem:[#allocation2 + $0x30] sm:$0xff] %v207
    %222 = vst [vmem:[#allocation2 + $0x38] sm:$0xff] %v212
    %223 = vst [vmem:[#allocation3] sm:$0xff] 0.0
    %v224 = vld [vmem:[#allocation3] sm:$0xff]
    %v225 = vld [vmem:[#allocation2] sm:$0xff]
    %v226 = vld [vmem:[#allocation9] sm:$0xff]
    %v227 = vld [vmem:[#allocation9 + $0x8] sm:$0xff]
    %v228 = vld [vmem:[#allocation9 + $0x10] sm:$0xff]
    %v229 = vld [vmem:[#allocation9 + $0x18] sm:$0xff]
    %v230 = vld [vmem:[#allocation9 + $0x20] sm:$0xff]
    %v231 = vld [vmem:[#allocation9 + $0x28] sm:$0xff]
    %v232 = vld [vmem:[#allocation9 + $0x30] sm:$0xff]
    %v233 = vld [vmem:[#allocation9 + $0x38] sm:$0xff]
    %v234 = vld [vmem:[#allocation9 + $0x40] sm:$0xff]
    %v235 = vld [vmem:[#allocation9 + $0x48] sm:$0xff]
    %v236 = vld [vmem:[#allocation9 + $0x50] sm:$0xff]
    %v237 = vld [vmem:[#allocation9 + $0x58] sm:$0xff]
    %v238 = vld [vmem:[#allocation9 + $0x60] sm:$0xff]
    %v239 = vld [vmem:[#allocation9 + $0x68] sm:$0xff]
    %v240 = vld [vmem:[#allocation9 + $0x70] sm:$0xff]
    %v241 = vld [vmem:[#allocation9 + $0x78] sm:$0xff]
    %242 = vmatprep.subr.mxu0 0.0
    %243 = vmatpush1.msra.mxu0 %v226
    %244 = vmatprep.subr.mxu0 0.0
    %245 = vmatpush1.msra.mxu0 %v227
    %246 = vmatprep.subr.mxu0 0.0
    %247 = vmatpush1.msra.mxu0 %v228
    %248 = vmatprep.subr.mxu0 0.0
    %249 = vmatpush1.msra.mxu0 %v229
    %250 = vmatprep.subr.mxu0 0.0
    %251 = vmatpush1.msra.mxu0 %v230
    %252 = vmatprep.subr.mxu0 0.0
    %253 = vmatpush1.msra.mxu0 %v231
    %254 = vmatprep.subr.mxu0 0.0
    %255 = vmatpush1.msra.mxu0 %v232
    %256 = vmatprep.subr.mxu0 0.0
    %257 = vmatpush1.msra.mxu0 %v233
    %258 = vmatprep.subr.mxu0 0.0
    %259 = vmatpush1.msra.mxu0 %v234
    %260 = vmatprep.subr.mxu0 0.0
    %261 = vmatpush1.msra.mxu0 %v235
    %262 = vmatprep.subr.mxu0 0.0
    %263 = vmatpush1.msra.mxu0 %v236
    %264 = vmatprep.subr.mxu0 0.0
    %265 = vmatpush1.msra.mxu0 %v237
    %266 = vmatprep.subr.mxu0 0.0
    %267 = vmatpush1.msra.mxu0 %v238
    %268 = vmatprep.subr.mxu0 0.0
    %269 = vmatpush1.msra.mxu0 %v239
    %270 = vmatprep.subr.mxu0 0.0
    %271 = vmatpush1.msra.mxu0 %v240
    %272 = vmatprep.subr.mxu0 0.0
    %273 = vmatpush1.msra.mxu0 %v241
    %274 = vmatprep.subr.mxu0 0.0
    %275 = vmatpush1.msra.mxu0 0.0
    %276 = vmatprep.subr.mxu0 0.0
    %277 = vmatpush1.msra.mxu0 0.0
    %278 = vmatprep.subr.mxu0 0.0
    %279 = vmatpush1.msra.mxu0 0.0
    %280 = vmatprep.subr.mxu0 0.0
    %281 = vmatpush1.msra.mxu0 0.0
    %282 = vmatprep.subr.mxu0 0.0
    %283 = vmatpush1.msra.mxu0 0.0
    %284 = vmatprep.subr.mxu0 0.0
    %285 = vmatpush1.msra.mxu0 0.0
    %286 = vmatprep.subr.mxu0 0.0
    %287 = vmatpush1.msra.mxu0 0.0
    %288 = vmatprep.subr.mxu0 0.0
    %289 = vmatpush1.msra.mxu0 0.0
    %290 = vmatprep.subr.mxu0 0.0
    %291 = vmatpush1.msra.mxu0 0.0
    %292 = vmatprep.subr.mxu0 0.0
    %293 = vmatpush1.msra.mxu0 0.0
    %294 = vmatprep.subr.mxu0 0.0
    %295 = vmatpush1.msra.mxu0 0.0
    %296 = vmatprep.subr.mxu0 0.0
    %297 = vmatpush1.msra.mxu0 0.0
    %298 = vmatprep.subr.mxu0 0.0
    %299 = vmatpush1.msra.mxu0 0.0
    %300 = vmatprep.subr.mxu0 0.0
    %301 = vmatpush1.msra.mxu0 0.0
    %302 = vmatprep.subr.mxu0 0.0
    %303 = vmatpush1.msra.mxu0 0.0
    %304 = vmatprep.subr.mxu0 0.0
    %305 = vmatpush1.msra.mxu0 0.0
    %306 = vmatprep.mubr.f32.mxu0 0.0
    %307 = vmatmul.mubr.f32.gmra.mrb[0].mxu0 %v224
    %v308 = vpop.f32.mrb[0].mxu0
    %v309 = vadd.f32 0.0, %v308
    %v310 = vpop.f32.mrb[0].mxu0
    %311 = vdwg.mxu0
    %v312 = vadd.f32 %v225, %v309
    %v313 = vtanh.pop %v312
    %314 = vst [vmem:[#allocation3] sm:$0xff] %v313
    %v315 = vld [vmem:[#allocation3] sm:$0xff]
    %s316 = scalar_lea.vmem [#allocation2], 8
    %v317 = vld [vmem:[%s316] sm:$0xff]
    %v318 = vld [vmem:[#allocation9] sm:$0xff]
    %v319 = vld [vmem:[#allocation9 + $0x8] sm:$0xff]
    %v320 = vld [vmem:[#allocation9 + $0x10] sm:$0xff]
    %v321 = vld [vmem:[#allocation9 + $0x18] sm:$0xff]
    %v322 = vld [vmem:[#allocation9 + $0x20] sm:$0xff]
    %v323 = vld [vmem:[#allocation9 + $0x28] sm:$0xff]
    %v324 = vld [vmem:[#allocation9 + $0x30] sm:$0xff]
    %v325 = vld [vmem:[#allocation9 + $0x38] sm:$0xff]
    %v326 = vld [vmem:[#allocation9 + $0x40] sm:$0xff]
    %v327 = vld [vmem:[#allocation9 + $0x48] sm:$0xff]
    %v328 = vld [vmem:[#allocation9 + $0x50] sm:$0xff]
    %v329 = vld [vmem:[#allocation9 + $0x58] sm:$0xff]
    %v330 = vld [vmem:[#allocation9 + $0x60] sm:$0xff]
    %v331 = vld [vmem:[#allocation9 + $0x68] sm:$0xff]
    %v332 = vld [vmem:[#allocation9 + $0x70] sm:$0xff]
    %v333 = vld [vmem:[#allocation9 + $0x78] sm:$0xff]
    %334 = vmatprep.subr.mxu0 0.0
    %335 = vmatpush1.msra.mxu0 %v318
    %336 = vmatprep.subr.mxu0 0.0
    %337 = vmatpush1.msra.mxu0 %v319
    %338 = vmatprep.subr.mxu0 0.0
    %339 = vmatpush1.msra.mxu0 %v320
    %340 = vmatprep.subr.mxu0 0.0
    %341 = vmatpush1.msra.mxu0 %v321
    %342 = vmatprep.subr.mxu0 0.0
    %343 = vmatpush1.msra.mxu0 %v322
    %344 = vmatprep.subr.mxu0 0.0
    %345 = vmatpush1.msra.mxu0 %v323
    %346 = vmatprep.subr.mxu0 0.0
    %347 = vmatpush1.msra.mxu0 %v324
    %348 = vmatprep.subr.mxu0 0.0
    %349 = vmatpush1.msra.mxu0 %v325
    %350 = vmatprep.subr.mxu0 0.0
    %351 = vmatpush1.msra.mxu0 %v326
    %352 = vmatprep.subr.mxu0 0.0
    %353 = vmatpush1.msra.mxu0 %v327
    %354 = vmatprep.subr.mxu0 0.0
    %355 = vmatpush1.msra.mxu0 %v328
    %356 = vmatprep.subr.mxu0 0.0
    %357 = vmatpush1.msra.mxu0 %v329
    %358 = vmatprep.subr.mxu0 0.0
    %359 = vmatpush1.msra.mxu0 %v330
    %360 = vmatprep.subr.mxu0 0.0
    %361 = vmatpush1.msra.mxu0 %v331
    %362 = vmatprep.subr.mxu0 0.0
    %363 = vmatpush1.msra.mxu0 %v332
    %364 = vmatprep.subr.mxu0 0.0
    %365 = vmatpush1.msra.mxu0 %v333
    %366 = vmatprep.subr.mxu0 0.0
    %367 = vmatpush1.msra.mxu0 0.0
    %368 = vmatprep.subr.mxu0 0.0
    %369 = vmatpush1.msra.mxu0 0.0
    %370 = vmatprep.subr.mxu0 0.0
    %371 = vmatpush1.msra.mxu0 0.0
    %372 = vmatprep.subr.mxu0 0.0
    %373 = vmatpush1.msra.mxu0 0.0
    %374 = vmatprep.subr.mxu0 0.0
    %375 = vmatpush1.msra.mxu0 0.0
    %376 = vmatprep.subr.mxu0 0.0
    %377 = vmatpush1.msra.mxu0 0.0
    %378 = vmatprep.subr.mxu0 0.0
    %379 = vmatpush1.msra.mxu0 0.0
    %380 = vmatprep.subr.mxu0 0.0
    %381 = vmatpush1.msra.mxu0 0.0
    %382 = vmatprep.subr.mxu0 0.0
    %383 = vmatpush1.msra.mxu0 0.0
    %384 = vmatprep.subr.mxu0 0.0
    %385 = vmatpush1.msra.mxu0 0.0
    %386 = vmatprep.subr.mxu0 0.0
    %387 = vmatpush1.msra.mxu0 0.0
    %388 = vmatprep.subr.mxu0 0.0
    %389 = vmatpush1.msra.mxu0 0.0
    %390 = vmatprep.subr.mxu0 0.0
    %391 = vmatpush1.msra.mxu0 0.0
    %392 = vmatprep.subr.mxu0 0.0
    %393 = vmatpush1.msra.mxu0 0.0
    %394 = vmatprep.subr.mxu0 0.0
    %395 = vmatpush1.msra.mxu0 0.0
    %396 = vmatprep.subr.mxu0 0.0
    %397 = vmatpush1.msra.mxu0 0.0
    %398 = vmatprep.mubr.f32.mxu0 0.0
    %399 = vmatmul.mubr.f32.gmra.mrb[0].mxu0 %v315
    %v400 = vpop.f32.mrb[0].mxu0
    %v401 = vadd.f32 0.0, %v400
    %v402 = vpop.f32.mrb[0].mxu0
    %403 = vdwg.mxu0
    %v404 = vadd.f32 %v317, %v401
    %v405 = vtanh.pop %v404
    %406 = vst [vmem:[#allocation3] sm:$0xff] %v405
    %v407 = vld [vmem:[#allocation3] sm:$0xff]
    %s408 = scalar_lea.vmem [#allocation2], 16
    %v409 = vld [vmem:[%s408] sm:$0xff]
    %v410 = vld [vmem:[#allocation9] sm:$0xff]
    %v411 = vld [vmem:[#allocation9 + $0x8] sm:$0xff]
    %v412 = vld [vmem:[#allocation9 + $0x10] sm:$0xff]
    %v413 = vld [vmem:[#allocation9 + $0x18] sm:$0xff]
    %v414 = vld [vmem:[#allocation9 + $0x20] sm:$0xff]
    %v415 = vld [vmem:[#allocation9 + $0x28] sm:$0xff]
    %v416 = vld [vmem:[#allocation9 + $0x30] sm:$0xff]
    %v417 = vld [vmem:[#allocation9 + $0x38] sm:$0xff]
    %v418 = vld [vmem:[#allocation9 + $0x40] sm:$0xff]
    %v419 = vld [vmem:[#allocation9 + $0x48] sm:$0xff]
    %v420 = vld [vmem:[#allocation9 + $0x50] sm:$0xff]
    %v421 = vld [vmem:[#allocation9 + $0x58] sm:$0xff]
    %v422 = vld [vmem:[#allocation9 + $0x60] sm:$0xff]
    %v423 = vld [vmem:[#allocation9 + $0x68] sm:$0xff]
    %v424 = vld [vmem:[#allocation9 + $0x70] sm:$0xff]
    %v425 = vld [vmem:[#allocation9 + $0x78] sm:$0xff]
    %426 = vmatprep.subr.mxu0 0.0
    %427 = vmatpush1.msra.mxu0 %v410
    %428 = vmatprep.subr.mxu0 0.0
    %429 = vmatpush1.msra.mxu0 %v411
    %430 = vmatprep.subr.mxu0 0.0
    %431 = vmatpush1.msra.mxu0 %v412
    %432 = vmatprep.subr.mxu0 0.0
    %433 = vmatpush1.msra.mxu0 %v413
    %434 = vmatprep.subr.mxu0 0.0
    %435 = vmatpush1.msra.mxu0 %v414
    %436 = vmatprep.subr.mxu0 0.0
    %437 = vmatpush1.msra.mxu0 %v415
    %438 = vmatprep.subr.mxu0 0.0
    %439 = vmatpush1.msra.mxu0 %v416
    %440 = vmatprep.subr.mxu0 0.0
    %441 = vmatpush1.msra.mxu0 %v417
    %442 = vmatprep.subr.mxu0 0.0
    %443 = vmatpush1.msra.mxu0 %v418
    %444 = vmatprep.subr.mxu0 0.0
    %445 = vmatpush1.msra.mxu0 %v419
    %446 = vmatprep.subr.mxu0 0.0
    %447 = vmatpush1.msra.mxu0 %v420
    %448 = vmatprep.subr.mxu0 0.0
    %449 = vmatpush1.msra.mxu0 %v421
    %450 = vmatprep.subr.mxu0 0.0
    %451 = vmatpush1.msra.mxu0 %v422
    %452 = vmatprep.subr.mxu0 0.0
    %453 = vmatpush1.msra.mxu0 %v423
    %454 = vmatprep.subr.mxu0 0.0
    %455 = vmatpush1.msra.mxu0 %v424
    %456 = vmatprep.subr.mxu0 0.0
    %457 = vmatpush1.msra.mxu0 %v425
    %458 = vmatprep.subr.mxu0 0.0
    %459 = vmatpush1.msra.mxu0 0.0
    %460 = vmatprep.subr.mxu0 0.0
    %461 = vmatpush1.msra.mxu0 0.0
    %462 = vmatprep.subr.mxu0 0.0
    %463 = vmatpush1.msra.mxu0 0.0
    %464 = vmatprep.subr.mxu0 0.0
    %465 = vmatpush1.msra.mxu0 0.0
    %466 = vmatprep.subr.mxu0 0.0
    %467 = vmatpush1.msra.mxu0 0.0
    %468 = vmatprep.subr.mxu0 0.0
    %469 = vmatpush1.msra.mxu0 0.0
    %470 = vmatprep.subr.mxu0 0.0
    %471 = vmatpush1.msra.mxu0 0.0
    %472 = vmatprep.subr.mxu0 0.0
    %473 = vmatpush1.msra.mxu0 0.0
    %474 = vmatprep.subr.mxu0 0.0
    %475 = vmatpush1.msra.mxu0 0.0
    %476 = vmatprep.subr.mxu0 0.0
    %477 = vmatpush1.msra.mxu0 0.0
    %478 = vmatprep.subr.mxu0 0.0
    %479 = vmatpush1.msra.mxu0 0.0
    %480 = vmatprep.subr.mxu0 0.0
    %481 = vmatpush1.msra.mxu0 0.0
    %482 = vmatprep.subr.mxu0 0.0
    %483 = vmatpush1.msra.mxu0 0.0
    %484 = vmatprep.subr.mxu0 0.0
    %485 = vmatpush1.msra.mxu0 0.0
    %486 = vmatprep.subr.mxu0 0.0
    %487 = vmatpush1.msra.mxu0 0.0
    %488 = vmatprep.subr.mxu0 0.0
    %489 = vmatpush1.msra.mxu0 0.0
    %490 = vmatprep.mubr.f32.mxu0 0.0
    %491 = vmatmul.mubr.f32.gmra.mrb[0].mxu0 %v407
    %v492 = vpop.f32.mrb[0].mxu0
    %v493 = vadd.f32 0.0, %v492
    %v494 = vpop.f32.mrb[0].mxu0
    %495 = vdwg.mxu0
    %v496 = vadd.f32 %v409, %v493
    %v497 = vtanh.pop %v496
    %498 = vst [vmem:[#allocation3] sm:$0xff] %v497
    %v499 = vld [vmem:[#allocation3] sm:$0xff]
    %s500 = scalar_lea.vmem [#allocation2], 24
    %v501 = vld [vmem:[%s500] sm:$0xff]
    %v502 = vld [vmem:[#allocation9] sm:$0xff]
    %v503 = vld [vmem:[#allocation9 + $0x8] sm:$0xff]
    %v504 = vld [vmem:[#allocation9 + $0x10] sm:$0xff]
    %v505 = vld [vmem:[#allocation9 + $0x18] sm:$0xff]
    %v506 = vld [vmem:[#allocation9 + $0x20] sm:$0xff]
    %v507 = vld [vmem:[#allocation9 + $0x28] sm:$0xff]
    %v508 = vld [vmem:[#allocation9 + $0x30] sm:$0xff]
    %v509 = vld [vmem:[#allocation9 + $0x38] sm:$0xff]
    %v510 = vld [vmem:[#allocation9 + $0x40] sm:$0xff]
    %v511 = vld [vmem:[#allocation9 + $0x48] sm:$0xff]
    %v512 = vld [vmem:[#allocation9 + $0x50] sm:$0xff]
    %v513 = vld [vmem:[#allocation9 + $0x58] sm:$0xff]
    %v514 = vld [vmem:[#allocation9 + $0x60] sm:$0xff]
    %v515 = vld [vmem:[#allocation9 + $0x68] sm:$0xff]
    %v516 = vld [vmem:[#allocation9 + $0x70] sm:$0xff]
    %v517 = vld [vmem:[#allocation9 + $0x78] sm:$0xff]
    %518 = vmatprep.subr.mxu0 0.0
    %519 = vmatpush1.msra.mxu0 %v502
    %520 = vmatprep.subr.mxu0 0.0
    %521 = vmatpush1.msra.mxu0 %v503
    %522 = vmatprep.subr.mxu0 0.0
    %523 = vmatpush1.msra.mxu0 %v504
    %524 = vmatprep.subr.mxu0 0.0
    %525 = vmatpush1.msra.mxu0 %v505
    %526 = vmatprep.subr.mxu0 0.0
    %527 = vmatpush1.msra.mxu0 %v506
    %528 = vmatprep.subr.mxu0 0.0
    %529 = vmatpush1.msra.mxu0 %v507
    %530 = vmatprep.subr.mxu0 0.0
    %531 = vmatpush1.msra.mxu0 %v508
    %532 = vmatprep.subr.mxu0 0.0
    %533 = vmatpush1.msra.mxu0 %v509
    %534 = vmatprep.subr.mxu0 0.0
    %535 = vmatpush1.msra.mxu0 %v510
    %536 = vmatprep.subr.mxu0 0.0
    %537 = vmatpush1.msra.mxu0 %v511
    %538 = vmatprep.subr.mxu0 0.0
    %539 = vmatpush1.msra.mxu0 %v512
    %540 = vmatprep.subr.mxu0 0.0
    %541 = vmatpush1.msra.mxu0 %v513
    %542 = vmatprep.subr.mxu0 0.0
    %543 = vmatpush1.msra.mxu0 %v514
    %544 = vmatprep.subr.mxu0 0.0
    %545 = vmatpush1.msra.mxu0 %v515
    %546 = vmatprep.subr.mxu0 0.0
    %547 = vmatpush1.msra.mxu0 %v516
    %548 = vmatprep.subr.mxu0 0.0
    %549 = vmatpush1.msra.mxu0 %v517
    %550 = vmatprep.subr.mxu0 0.0
    %551 = vmatpush1.msra.mxu0 0.0
    %552 = vmatprep.subr.mxu0 0.0
    %553 = vmatpush1.msra.mxu0 0.0
    %554 = vmatprep.subr.mxu0 0.0
    %555 = vmatpush1.msra.mxu0 0.0
    %556 = vmatprep.subr.mxu0 0.0
    %557 = vmatpush1.msra.mxu0 0.0
    %558 = vmatprep.subr.mxu0 0.0
    %559 = vmatpush1.msra.mxu0 0.0
    %560 = vmatprep.subr.mxu0 0.0
    %561 = vmatpush1.msra.mxu0 0.0
    %562 = vmatprep.subr.mxu0 0.0
    %563 = vmatpush1.msra.mxu0 0.0
    %564 = vmatprep.subr.mxu0 0.0
    %565 = vmatpush1.msra.mxu0 0.0
    %566 = vmatprep.subr.mxu0 0.0
    %567 = vmatpush1.msra.mxu0 0.0
    %568 = vmatprep.subr.mxu0 0.0
    %569 = vmatpush1.msra.mxu0 0.0
    %570 = vmatprep.subr.mxu0 0.0
    %571 = vmatpush1.msra.mxu0 0.0
    %572 = vmatprep.subr.mxu0 0.0
    %573 = vmatpush1.msra.mxu0 0.0
    %574 = vmatprep.subr.mxu0 0.0
    %575 = vmatpush1.msra.mxu0 0.0
    %576 = vmatprep.subr.mxu0 0.0
    %577 = vmatpush1.msra.mxu0 0.0
    %578 = vmatprep.subr.mxu0 0.0
    %579 = vmatpush1.msra.mxu0 0.0
    %580 = vmatprep.subr.mxu0 0.0
    %581 = vmatpush1.msra.mxu0 0.0
    %582 = vmatprep.mubr.f32.mxu0 0.0
    %583 = vmatmul.mubr.f32.gmra.mrb[0].mxu0 %v499
    %v584 = vpop.f32.mrb[0].mxu0
    %v585 = vadd.f32 0.0, %v584
    %v586 = vpop.f32.mrb[0].mxu0
    %587 = vdwg.mxu0
    %v588 = vadd.f32 %v501, %v585
    %v589 = vtanh.pop %v588
    %590 = vst [vmem:[#allocation3] sm:$0xff] %v589
    %v591 = vld [vmem:[#allocation3] sm:$0xff]
    %s592 = scalar_lea.vmem [#allocation2], 32
    %v593 = vld [vmem:[%s592] sm:$0xff]
    %v594 = vld [vmem:[#allocation9] sm:$0xff]
    %v595 = vld [vmem:[#allocation9 + $0x8] sm:$0xff]
    %v596 = vld [vmem:[#allocation9 + $0x10] sm:$0xff]
    %v597 = vld [vmem:[#allocation9 + $0x18] sm:$0xff]
    %v598 = vld [vmem:[#allocation9 + $0x20] sm:$0xff]
    %v599 = vld [vmem:[#allocation9 + $0x28] sm:$0xff]
    %v600 = vld [vmem:[#allocation9 + $0x30] sm:$0xff]
    %v601 = vld [vmem:[#allocation9 + $0x38] sm:$0xff]
    %v602 = vld [vmem:[#allocation9 + $0x40] sm:$0xff]
    %v603 = vld [vmem:[#allocation9 + $0x48] sm:$0xff]
    %v604 = vld [vmem:[#allocation9 + $0x50] sm:$0xff]
    %v605 = vld [vmem:[#allocation9 + $0x58] sm:$0xff]
    %v606 = vld [vmem:[#allocation9 + $0x60] sm:$0xff]
    %v607 = vld [vmem:[#allocation9 + $0x68] sm:$0xff]
    %v608 = vld [vmem:[#allocation9 + $0x70] sm:$0xff]
    %v609 = vld [vmem:[#allocation9 + $0x78] sm:$0xff]
    %610 = vmatprep.subr.mxu0 0.0
    %611 = vmatpush1.msra.mxu0 %v594
    %612 = vmatprep.subr.mxu0 0.0
    %613 = vmatpush1.msra.mxu0 %v595
    %614 = vmatprep.subr.mxu0 0.0
    %615 = vmatpush1.msra.mxu0 %v596
    %616 = vmatprep.subr.mxu0 0.0
    %617 = vmatpush1.msra.mxu0 %v597
    %618 = vmatprep.subr.mxu0 0.0
    %619 = vmatpush1.msra.mxu0 %v598
    %620 = vmatprep.subr.mxu0 0.0
    %621 = vmatpush1.msra.mxu0 %v599
    %622 = vmatprep.subr.mxu0 0.0
    %623 = vmatpush1.msra.mxu0 %v600
    %624 = vmatprep.subr.mxu0 0.0
    %625 = vmatpush1.msra.mxu0 %v601
    %626 = vmatprep.subr.mxu0 0.0
    %627 = vmatpush1.msra.mxu0 %v602
    %628 = vmatprep.subr.mxu0 0.0
    %629 = vmatpush1.msra.mxu0 %v603
    %630 = vmatprep.subr.mxu0 0.0
    %631 = vmatpush1.msra.mxu0 %v604
    %632 = vmatprep.subr.mxu0 0.0
    %633 = vmatpush1.msra.mxu0 %v605
    %634 = vmatprep.subr.mxu0 0.0
    %635 = vmatpush1.msra.mxu0 %v606
    %636 = vmatprep.subr.mxu0 0.0
    %637 = vmatpush1.msra.mxu0 %v607
    %638 = vmatprep.subr.mxu0 0.0
    %639 = vmatpush1.msra.mxu0 %v608
    %640 = vmatprep.subr.mxu0 0.0
    %641 = vmatpush1.msra.mxu0 %v609
    %642 = vmatprep.subr.mxu0 0.0
    %643 = vmatpush1.msra.mxu0 0.0
    %644 = vmatprep.subr.mxu0 0.0
    %645 = vmatpush1.msra.mxu0 0.0
    %646 = vmatprep.subr.mxu0 0.0
    %647 = vmatpush1.msra.mxu0 0.0
    %648 = vmatprep.subr.mxu0 0.0
    %649 = vmatpush1.msra.mxu0 0.0
    %650 = vmatprep.subr.mxu0 0.0
    %651 = vmatpush1.msra.mxu0 0.0
    %652 = vmatprep.subr.mxu0 0.0
    %653 = vmatpush1.msra.mxu0 0.0
    %654 = vmatprep.subr.mxu0 0.0
    %655 = vmatpush1.msra.mxu0 0.0
    %656 = vmatprep.subr.mxu0 0.0
    %657 = vmatpush1.msra.mxu0 0.0
    %658 = vmatprep.subr.mxu0 0.0
    %659 = vmatpush1.msra.mxu0 0.0
    %660 = vmatprep.subr.mxu0 0.0
    %661 = vmatpush1.msra.mxu0 0.0
    %662 = vmatprep.subr.mxu0 0.0
    %663 = vmatpush1.msra.mxu0 0.0
    %664 = vmatprep.subr.mxu0 0.0
    %665 = vmatpush1.msra.mxu0 0.0
    %666 = vmatprep.subr.mxu0 0.0
    %667 = vmatpush1.msra.mxu0 0.0
    %668 = vmatprep.subr.mxu0 0.0
    %669 = vmatpush1.msra.mxu0 0.0
    %670 = vmatprep.subr.mxu0 0.0
    %671 = vmatpush1.msra.mxu0 0.0
    %672 = vmatprep.subr.mxu0 0.0
    %673 = vmatpush1.msra.mxu0 0.0
    %674 = vmatprep.mubr.f32.mxu0 0.0
    %675 = vmatmul.mubr.f32.gmra.mrb[0].mxu0 %v591
    %v676 = vpop.f32.mrb[0].mxu0
    %v677 = vadd.f32 0.0, %v676
    %v678 = vpop.f32.mrb[0].mxu0
    %679 = vdwg.mxu0
    %v680 = vadd.f32 %v593, %v677
    %v681 = vtanh.pop %v680
    %682 = vst [vmem:[#allocation3] sm:$0xff] %v681
    %v683 = vld [vmem:[#allocation3] sm:$0xff]
    %s684 = scalar_lea.vmem [#allocation2], 40
    %v685 = vld [vmem:[%s684] sm:$0xff]
    %v686 = vld [vmem:[#allocation9] sm:$0xff]
    %v687 = vld [vmem:[#allocation9 + $0x8] sm:$0xff]
    %v688 = vld [vmem:[#allocation9 + $0x10] sm:$0xff]
    %v689 = vld [vmem:[#allocation9 + $0x18] sm:$0xff]
    %v690 = vld [vmem:[#allocation9 + $0x20] sm:$0xff]
    %v691 = vld [vmem:[#allocation9 + $0x28] sm:$0xff]
    %v692 = vld [vmem:[#allocation9 + $0x30] sm:$0xff]
    %v693 = vld [vmem:[#allocation9 + $0x38] sm:$0xff]
    %v694 = vld [vmem:[#allocation9 + $0x40] sm:$0xff]
    %v695 = vld [vmem:[#allocation9 + $0x48] sm:$0xff]
    %v696 = vld [vmem:[#allocation9 + $0x50] sm:$0xff]
    %v697 = vld [vmem:[#allocation9 + $0x58] sm:$0xff]
    %v698 = vld [vmem:[#allocation9 + $0x60] sm:$0xff]
    %v699 = vld [vmem:[#allocation9 + $0x68] sm:$0xff]
    %v700 = vld [vmem:[#allocation9 + $0x70] sm:$0xff]
    %v701 = vld [vmem:[#allocation9 + $0x78] sm:$0xff]
    %702 = vmatprep.subr.mxu0 0.0
    %703 = vmatpush1.msra.mxu0 %v686
    %704 = vmatprep.subr.mxu0 0.0
    %705 = vmatpush1.msra.mxu0 %v687
    %706 = vmatprep.subr.mxu0 0.0
    %707 = vmatpush1.msra.mxu0 %v688
    %708 = vmatprep.subr.mxu0 0.0
    %709 = vmatpush1.msra.mxu0 %v689
    %710 = vmatprep.subr.mxu0 0.0
    %711 = vmatpush1.msra.mxu0 %v690
    %712 = vmatprep.subr.mxu0 0.0
    %713 = vmatpush1.msra.mxu0 %v691
    %714 = vmatprep.subr.mxu0 0.0
    %715 = vmatpush1.msra.mxu0 %v692
    %716 = vmatprep.subr.mxu0 0.0
    %717 = vmatpush1.msra.mxu0 %v693
    %718 = vmatprep.subr.mxu0 0.0
    %719 = vmatpush1.msra.mxu0 %v694
    %720 = vmatprep.subr.mxu0 0.0
    %721 = vmatpush1.msra.mxu0 %v695
    %722 = vmatprep.subr.mxu0 0.0
    %723 = vmatpush1.msra.mxu0 %v696
    %724 = vmatprep.subr.mxu0 0.0
    %725 = vmatpush1.msra.mxu0 %v697
    %726 = vmatprep.subr.mxu0 0.0
    %727 = vmatpush1.msra.mxu0 %v698
    %728 = vmatprep.subr.mxu0 0.0
    %729 = vmatpush1.msra.mxu0 %v699
    %730 = vmatprep.subr.mxu0 0.0
    %731 = vmatpush1.msra.mxu0 %v700
    %732 = vmatprep.subr.mxu0 0.0
    %733 = vmatpush1.msra.mxu0 %v701
    %734 = vmatprep.subr.mxu0 0.0
    %735 = vmatpush1.msra.mxu0 0.0
    %736 = vmatprep.subr.mxu0 0.0
    %737 = vmatpush1.msra.mxu0 0.0
    %738 = vmatprep.subr.mxu0 0.0
    %739 = vmatpush1.msra.mxu0 0.0
    %740 = vmatprep.subr.mxu0 0.0
    %741 = vmatpush1.msra.mxu0 0.0
    %742 = vmatprep.subr.mxu0 0.0
    %743 = vmatpush1.msra.mxu0 0.0
    %744 = vmatprep.subr.mxu0 0.0
    %745 = vmatpush1.msra.mxu0 0.0
    %746 = vmatprep.subr.mxu0 0.0
    %747 = vmatpush1.msra.mxu0 0.0
    %748 = vmatprep.subr.mxu0 0.0
    %749 = vmatpush1.msra.mxu0 0.0
    %750 = vmatprep.subr.mxu0 0.0
    %751 = vmatpush1.msra.mxu0 0.0
    %752 = vmatprep.subr.mxu0 0.0
    %753 = vmatpush1.msra.mxu0 0.0
    %754 = vmatprep.subr.mxu0 0.0
    %755 = vmatpush1.msra.mxu0 0.0
    %756 = vmatprep.subr.mxu0 0.0
    %757 = vmatpush1.msra.mxu0 0.0
    %758 = vmatprep.subr.mxu0 0.0
    %759 = vmatpush1.msra.mxu0 0.0
    %760 = vmatprep.subr.mxu0 0.0
    %761 = vmatpush1.msra.mxu0 0.0
    %762 = vmatprep.subr.mxu0 0.0
    %763 = vmatpush1.msra.mxu0 0.0
    %764 = vmatprep.subr.mxu0 0.0
    %765 = vmatpush1.msra.mxu0 0.0
    %766 = vmatprep.mubr.f32.mxu0 0.0
    %767 = vmatmul.mubr.f32.gmra.mrb[0].mxu0 %v683
    %v768 = vpop.f32.mrb[0].mxu0
    %v769 = vadd.f32 0.0, %v768
    %v770 = vpop.f32.mrb[0].mxu0
    %771 = vdwg.mxu0
    %v772 = vadd.f32 %v685, %v769
    %v773 = vtanh.pop %v772
    %774 = vst [vmem:[#allocation3] sm:$0xff] %v773
    %v775 = vld [vmem:[#allocation3] sm:$0xff]
    %s776 = scalar_lea.vmem [#allocation2], 48
    %v777 = vld [vmem:[%s776] sm:$0xff]
    %v778 = vld [vmem:[#allocation9] sm:$0xff]
    %v779 = vld [vmem:[#allocation9 + $0x8] sm:$0xff]
    %v780 = vld [vmem:[#allocation9 + $0x10] sm:$0xff]
    %v781 = vld [vmem:[#allocation9 + $0x18] sm:$0xff]
    %v782 = vld [vmem:[#allocation9 + $0x20] sm:$0xff]
    %v783 = vld [vmem:[#allocation9 + $0x28] sm:$0xff]
    %v784 = vld [vmem:[#allocation9 + $0x30] sm:$0xff]
    %v785 = vld [vmem:[#allocation9 + $0x38] sm:$0xff]
    %v786 = vld [vmem:[#allocation9 + $0x40] sm:$0xff]
    %v787 = vld [vmem:[#allocation9 + $0x48] sm:$0xff]
    %v788 = vld [vmem:[#allocation9 + $0x50] sm:$0xff]
    %v789 = vld [vmem:[#allocation9 + $0x58] sm:$0xff]
    %v790 = vld [vmem:[#allocation9 + $0x60] sm:$0xff]
    %v791 = vld [vmem:[#allocation9 + $0x68] sm:$0xff]
    %v792 = vld [vmem:[#allocation9 + $0x70] sm:$0xff]
    %v793 = vld [vmem:[#allocation9 + $0x78] sm:$0xff]
    %794 = vmatprep.subr.mxu0 0.0
    %795 = vmatpush1.msra.mxu0 %v778
    %796 = vmatprep.subr.mxu0 0.0
    %797 = vmatpush1.msra.mxu0 %v779
    %798 = vmatprep.subr.mxu0 0.0
    %799 = vmatpush1.msra.mxu0 %v780
    %800 = vmatprep.subr.mxu0 0.0
    %801 = vmatpush1.msra.mxu0 %v781
    %802 = vmatprep.subr.mxu0 0.0
    %803 = vmatpush1.msra.mxu0 %v782
    %804 = vmatprep.subr.mxu0 0.0
    %805 = vmatpush1.msra.mxu0 %v783
    %806 = vmatprep.subr.mxu0 0.0
    %807 = vmatpush1.msra.mxu0 %v784
    %808 = vmatprep.subr.mxu0 0.0
    %809 = vmatpush1.msra.mxu0 %v785
    %810 = vmatprep.subr.mxu0 0.0
    %811 = vmatpush1.msra.mxu0 %v786
    %812 = vmatprep.subr.mxu0 0.0
    %813 = vmatpush1.msra.mxu0 %v787
    %814 = vmatprep.subr.mxu0 0.0
    %815 = vmatpush1.msra.mxu0 %v788
    %816 = vmatprep.subr.mxu0 0.0
    %817 = vmatpush1.msra.mxu0 %v789
    %818 = vmatprep.subr.mxu0 0.0
    %819 = vmatpush1.msra.mxu0 %v790
    %820 = vmatprep.subr.mxu0 0.0
    %821 = vmatpush1.msra.mxu0 %v791
    %822 = vmatprep.subr.mxu0 0.0
    %823 = vmatpush1.msra.mxu0 %v792
    %824 = vmatprep.subr.mxu0 0.0
    %825 = vmatpush1.msra.mxu0 %v793
    %826 = vmatprep.subr.mxu0 0.0
    %827 = vmatpush1.msra.mxu0 0.0
    %828 = vmatprep.subr.mxu0 0.0
    %829 = vmatpush1.msra.mxu0 0.0
    %830 = vmatprep.subr.mxu0 0.0
    %831 = vmatpush1.msra.mxu0 0.0
    %832 = vmatprep.subr.mxu0 0.0
    %833 = vmatpush1.msra.mxu0 0.0
    %834 = vmatprep.subr.mxu0 0.0
    %835 = vmatpush1.msra.mxu0 0.0
    %836 = vmatprep.subr.mxu0 0.0
    %837 = vmatpush1.msra.mxu0 0.0
    %838 = vmatprep.subr.mxu0 0.0
    %839 = vmatpush1.msra.mxu0 0.0
    %840 = vmatprep.subr.mxu0 0.0
    %841 = vmatpush1.msra.mxu0 0.0
    %842 = vmatprep.subr.mxu0 0.0
    %843 = vmatpush1.msra.mxu0 0.0
    %844 = vmatprep.subr.mxu0 0.0
    %845 = vmatpush1.msra.mxu0 0.0
    %846 = vmatprep.subr.mxu0 0.0
    %847 = vmatpush1.msra.mxu0 0.0
    %848 = vmatprep.subr.mxu0 0.0
    %849 = vmatpush1.msra.mxu0 0.0
    %850 = vmatprep.subr.mxu0 0.0
    %851 = vmatpush1.msra.mxu0 0.0
    %852 = vmatprep.subr.mxu0 0.0
    %853 = vmatpush1.msra.mxu0 0.0
    %854 = vmatprep.subr.mxu0 0.0
    %855 = vmatpush1.msra.mxu0 0.0
    %856 = vmatprep.subr.mxu0 0.0
    %857 = vmatpush1.msra.mxu0 0.0
    %858 = vmatprep.mubr.f32.mxu0 0.0
    %859 = vmatmul.mubr.f32.gmra.mrb[0].mxu0 %v775
    %v860 = vpop.f32.mrb[0].mxu0
    %v861 = vadd.f32 0.0, %v860
    %v862 = vpop.f32.mrb[0].mxu0
    %863 = vdwg.mxu0
    %v864 = vadd.f32 %v777, %v861
    %v865 = vtanh.pop %v864
    %866 = vst [vmem:[#allocation3] sm:$0xff] %v865
    %v867 = vld [vmem:[#allocation3] sm:$0xff]
    %s868 = scalar_lea.vmem [#allocation2], 56
    %v869 = vld [vmem:[%s868] sm:$0xff]
    %v870 = vld [vmem:[#allocation9] sm:$0xff]
    %v871 = vld [vmem:[#allocation9 + $0x8] sm:$0xff]
    %v872 = vld [vmem:[#allocation9 + $0x10] sm:$0xff]
    %v873 = vld [vmem:[#allocation9 + $0x18] sm:$0xff]
    %v874 = vld [vmem:[#allocation9 + $0x20] sm:$0xff]
    %v875 = vld [vmem:[#allocation9 + $0x28] sm:$0xff]
    %v876 = vld [vmem:[#allocation9 + $0x30] sm:$0xff]
    %v877 = vld [vmem:[#allocation9 + $0x38] sm:$0xff]
    %v878 = vld [vmem:[#allocation9 + $0x40] sm:$0xff]
    %v879 = vld [vmem:[#allocation9 + $0x48] sm:$0xff]
    %v880 = vld [vmem:[#allocation9 + $0x50] sm:$0xff]
    %v881 = vld [vmem:[#allocation9 + $0x58] sm:$0xff]
    %v882 = vld [vmem:[#allocation9 + $0x60] sm:$0xff]
    %v883 = vld [vmem:[#allocation9 + $0x68] sm:$0xff]
    %v884 = vld [vmem:[#allocation9 + $0x70] sm:$0xff]
    %v885 = vld [vmem:[#allocation9 + $0x78] sm:$0xff]
    %886 = vmatprep.subr.mxu0 0.0
    %887 = vmatpush1.msra.mxu0 %v870
    %888 = vmatprep.subr.mxu0 0.0
    %889 = vmatpush1.msra.mxu0 %v871
    %890 = vmatprep.subr.mxu0 0.0
    %891 = vmatpush1.msra.mxu0 %v872
    %892 = vmatprep.subr.mxu0 0.0
    %893 = vmatpush1.msra.mxu0 %v873
    %894 = vmatprep.subr.mxu0 0.0
    %895 = vmatpush1.msra.mxu0 %v874
    %896 = vmatprep.subr.mxu0 0.0
    %897 = vmatpush1.msra.mxu0 %v875
    %898 = vmatprep.subr.mxu0 0.0
    %899 = vmatpush1.msra.mxu0 %v876
    %900 = vmatprep.subr.mxu0 0.0
    %901 = vmatpush1.msra.mxu0 %v877
    %902 = vmatprep.subr.mxu0 0.0
    %903 = vmatpush1.msra.mxu0 %v878
    %904 = vmatprep.subr.mxu0 0.0
    %905 = vmatpush1.msra.mxu0 %v879
    %906 = vmatprep.subr.mxu0 0.0
    %907 = vmatpush1.msra.mxu0 %v880
    %908 = vmatprep.subr.mxu0 0.0
    %909 = vmatpush1.msra.mxu0 %v881
    %910 = vmatprep.subr.mxu0 0.0
    %911 = vmatpush1.msra.mxu0 %v882
    %912 = vmatprep.subr.mxu0 0.0
    %913 = vmatpush1.msra.mxu0 %v883
    %914 = vmatprep.subr.mxu0 0.0
    %915 = vmatpush1.msra.mxu0 %v884
    %916 = vmatprep.subr.mxu0 0.0
    %917 = vmatpush1.msra.mxu0 %v885
    %918 = vmatprep.subr.mxu0 0.0
    %919 = vmatpush1.msra.mxu0 0.0
    %920 = vmatprep.subr.mxu0 0.0
    %921 = vmatpush1.msra.mxu0 0.0
    %922 = vmatprep.subr.mxu0 0.0
    %923 = vmatpush1.msra.mxu0 0.0
    %924 = vmatprep.subr.mxu0 0.0
    %925 = vmatpush1.msra.mxu0 0.0
    %926 = vmatprep.subr.mxu0 0.0
    %927 = vmatpush1.msra.mxu0 0.0
    %928 = vmatprep.subr.mxu0 0.0
    %929 = vmatpush1.msra.mxu0 0.0
    %930 = vmatprep.subr.mxu0 0.0
    %931 = vmatpush1.msra.mxu0 0.0
    %932 = vmatprep.subr.mxu0 0.0
    %933 = vmatpush1.msra.mxu0 0.0
    %934 = vmatprep.subr.mxu0 0.0
    %935 = vmatpush1.msra.mxu0 0.0
    %936 = vmatprep.subr.mxu0 0.0
    %937 = vmatpush1.msra.mxu0 0.0
    %938 = vmatprep.subr.mxu0 0.0
    %939 = vmatpush1.msra.mxu0 0.0
    %940 = vmatprep.subr.mxu0 0.0
    %941 = vmatpush1.msra.mxu0 0.0
    %942 = vmatprep.subr.mxu0 0.0
    %943 = vmatpush1.msra.mxu0 0.0
    %944 = vmatprep.subr.mxu0 0.0
    %945 = vmatpush1.msra.mxu0 0.0
    %946 = vmatprep.subr.mxu0 0.0
    %947 = vmatpush1.msra.mxu0 0.0
    %948 = vmatprep.subr.mxu0 0.0
    %949 = vmatpush1.msra.mxu0 0.0
    %950 = vmatprep.mubr.f32.mxu0 0.0
    %951 = vmatmul.mubr.f32.gmra.mrb[0].mxu0 %v867
    %v952 = vpop.f32.mrb[0].mxu0
    %v953 = vadd.f32 0.0, %v952
    %v954 = vpop.f32.mrb[0].mxu0
    %955 = vdwg.mxu0
    %v956 = vadd.f32 %v869, %v953
    %v957 = vtanh.pop %v956
    %958 = vst [vmem:[#allocation3] sm:$0xff] %v957
    %v959 = vld [vmem:[#allocation3] sm:$0xff]
    %v960 = vld [vmem:[#allocation10] sm:$0xff]
    %v961 = vld [vmem:[#allocation10 + $0x8] sm:$0xff]
    %v962 = vld [vmem:[#allocation10 + $0x10] sm:$0xff]
    %v963 = vld [vmem:[#allocation10 + $0x18] sm:$0xff]
    %v964 = vld [vmem:[#allocation10 + $0x20] sm:$0xff]
    %v965 = vld [vmem:[#allocation10 + $0x28] sm:$0xff]
    %v966 = vld [vmem:[#allocation10 + $0x30] sm:$0xff]
    %v967 = vld [vmem:[#allocation10 + $0x38] sm:$0xff]
    %v968 = vld [vmem:[#allocation10 + $0x40] sm:$0xff]
    %v969 = vld [vmem:[#allocation10 + $0x48] sm:$0xff]
    %v970 = vld [vmem:[#allocation10 + $0x50] sm:$0xff]
    %v971 = vld [vmem:[#allocation10 + $0x58] sm:$0xff]
    %v972 = vld [vmem:[#allocation10 + $0x60] sm:$0xff]
    %v973 = vld [vmem:[#allocation10 + $0x68] sm:$0xff]
    %v974 = vld [vmem:[#allocation10 + $0x70] sm:$0xff]
    %v975 = vld [vmem:[#allocation10 + $0x78] sm:$0xff]
    %v976 = vld [vmem:[%s5] sm:$0x1]
    %v978 = vlaneseq
    %v979 = vshrl.u32 %v978, 7
    %v980 = vsub.s32 0, %v979
    %v981 = vrot.slane %v976, %v980
    %983 = vmatprep.subr.mxu0 0.0
    %984 = vmatpush1.msra.mxu0 %v960
    %985 = vmatprep.subr.mxu0 0.0
    %986 = vmatpush1.msra.mxu0 %v961
    %987 = vmatprep.subr.mxu0 0.0
    %988 = vmatpush1.msra.mxu0 %v962
    %989 = vmatprep.subr.mxu0 0.0
    %990 = vmatpush1.msra.mxu0 %v963
    %991 = vmatprep.subr.mxu0 0.0
    %992 = vmatpush1.msra.mxu0 %v964
    %993 = vmatprep.subr.mxu0 0.0
    %994 = vmatpush1.msra.mxu0 %v965
    %995 = vmatprep.subr.mxu0 0.0
    %996 = vmatpush1.msra.mxu0 %v966
    %997 = vmatprep.subr.mxu0 0.0
    %998 = vmatpush1.msra.mxu0 %v967
    %999 = vmatprep.subr.mxu0 0.0
    %1000 = vmatpush1.msra.mxu0 %v968
    %1001 = vmatprep.subr.mxu0 0.0
    %1002 = vmatpush1.msra.mxu0 %v969
    %1003 = vmatprep.subr.mxu0 0.0
    %1004 = vmatpush1.msra.mxu0 %v970
    %1005 = vmatprep.subr.mxu0 0.0
    %1006 = vmatpush1.msra.mxu0 %v971
    %1007 = vmatprep.subr.mxu0 0.0
    %1008 = vmatpush1.msra.mxu0 %v972
    %1009 = vmatprep.subr.mxu0 0.0
    %1010 = vmatpush1.msra.mxu0 %v973
    %1011 = vmatprep.subr.mxu0 0.0
    %1012 = vmatpush1.msra.mxu0 %v974
    %1013 = vmatprep.subr.mxu0 0.0
    %1014 = vmatpush1.msra.mxu0 %v975
    %1015 = vmatprep.subr.mxu0 0.0
    %1016 = vmatpush1.msra.mxu0 0.0
    %1017 = vmatprep.subr.mxu0 0.0
    %1018 = vmatpush1.msra.mxu0 0.0
    %1019 = vmatprep.subr.mxu0 0.0
    %1020 = vmatpush1.msra.mxu0 0.0
    %1021 = vmatprep.subr.mxu0 0.0
    %1022 = vmatpush1.msra.mxu0 0.0
    %1023 = vmatprep.subr.mxu0 0.0
    %1024 = vmatpush1.msra.mxu0 0.0
    %1025 = vmatprep.subr.mxu0 0.0
    %1026 = vmatpush1.msra.mxu0 0.0
    %1027 = vmatprep.subr.mxu0 0.0
    %1028 = vmatpush1.msra.mxu0 0.0
    %1029 = vmatprep.subr.mxu0 0.0
    %1030 = vmatpush1.msra.mxu0 0.0
    %1031 = vmatprep.subr.mxu0 0.0
    %1032 = vmatpush1.msra.mxu0 0.0
    %1033 = vmatprep.subr.mxu0 0.0
    %1034 = vmatpush1.msra.mxu0 0.0
    %1035 = vmatprep.subr.mxu0 0.0
    %1036 = vmatpush1.msra.mxu0 0.0
    %1037 = vmatprep.subr.mxu0 0.0
    %1038 = vmatpush1.msra.mxu0 0.0
    %1039 = vmatprep.subr.mxu0 0.0
    %1040 = vmatpush1.msra.mxu0 0.0
    %1041 = vmatprep.subr.mxu0 0.0
    %1042 = vmatpush1.msra.mxu0 0.0
    %1043 = vmatprep.subr.mxu0 0.0
    %1044 = vmatpush1.msra.mxu0 0.0
    %1045 = vmatprep.subr.mxu0 0.0
    %1046 = vmatpush1.msra.mxu0 0.0
    %1047 = vmatprep.mubr.f32.mxu0 0.0
    %1048 = vmatmul.mubr.f32.gmra.mrb[0].mxu0 %v959
    %v1049 = vpop.f32.mrb[0].mxu0
    %v1050 = vadd.f32 %v981, %v1049
    %v1051 = vpop.f32.mrb[0].mxu0
    %1052 = vdwg.mxu0
    %1053 = vst [vmem:[#allocation12] sm:$0xff] %v1050
    // Predicated region
    $region42: #{tpu_custom_call.1} parent=1 // pred_check
      _
    $region43: #{tpu_custom_call.1} parent=1 // pred_check_branch
      %1055 = sbr.rel (0) target = $region45
    $region44: #{tpu_custom_call.1} parent=1 // pred_region
      %s1057 = ssub.s32 128, 128
      %1058 = vsyncadd [#allocation6], %s1057
      %s1060 = sshll.u32 [#allocation12], 4
      %s1061 = int_to_ptr.vmem [resolvable:$true] %s1060
      %1063 = dma.vmem_to_hbm [thread:$0]  %s1061, 128, %s6, [#allocation6]
    $region45: #{tpu_custom_call.1} parent=1 // pred_fallthru
      _
    // Predicated region
    $region46: #{tpu_custom_call.1} parent=1 // pred_check
      _
    $region47: #{tpu_custom_call.1} parent=1 // pred_check_branch
      %1065 = sbr.rel (0) target = $region49
    $region48: #{tpu_custom_call.1} parent=1 // pred_region
      %1066 = dma.done [#allocation6], 128
    $region49: #{tpu_custom_call.1} parent=1 // pred_fallthru
      _
    %1067 = vsyncpa [#allocation5], 1
    %1068 = vsyncpa [#allocation8], 1
    %1069 = vsyncpa [#allocation11], 1
    %1070 = vsyncpa [#allocation6], 1

</llo_original>
